<compile_context>
chip_gen: v5e
topology: v5e:2x2
jax: 0.10.0
libtpu: 0.0.40
codegen_flags: <defaults>
</compile_context>

<pallas_src>
import jax
import jax.numpy as jnp
from jax.experimental import pallas as pl
from jax.experimental.pallas import tpu as pltpu


def _shortcut_kernel(x_ref, sdn_ref, sup_ref, w1_ref, b1_ref, w2_ref, b2_ref,
                     out_ref):
    # x_ref  : (B, H, WC)   activation rows, WC = W*Cp = 128 (full lane width)
    # sdn_ref: (M, M)       0/1 operator picking row h-1 of the same image
    # sup_ref: (M, M)       0/1 operator picking row h+1 of the same image
    # w*_ref : (3*WC, WC)   stacked banded conv matrices (kernel rows kh=0,1,2)
    # b*_ref : (1, WC)      bias tiled over W
    # out_ref: (B, H, WC)
    B, H, WC = x_ref.shape
    M = B * H

    # Center slab loaded ONCE; reused for conv1's kh=1 term and the residual.
    x = x_ref[...].reshape(M, WC)        # minor dim unchanged -> no relayout
    sdn = sdn_ref[...]
    sup = sup_ref[...]

    def conv3x3(a, w_ref, b_ref):
        # H halo via tiny exact 0/1 shift matmuls; W halo is baked into the
        # banded weights.  Single K = 3*WC matmul per conv (one MXU drain).
        above = jnp.dot(sdn, a, preferred_element_type=jnp.float32)   # row h-1
        below = jnp.dot(sup, a, preferred_element_type=jnp.float32)   # row h+1
        lhs = jnp.concatenate([above, a, below], axis=1)              # (M, 3*WC)
        return jnp.dot(lhs, w_ref[...],
                       preferred_element_type=jnp.float32) + b_ref[...]

    h1 = jnp.maximum(conv3x3(x, w1_ref, b1_ref), 0.0)   # stays in vregs
    y = conv3x3(h1, w2_ref, b2_ref)

    # Shortcut: out = x + sub(x).  WC = 128 -> unmasked full-lane stores.
    out_ref[...] = (x + y).reshape(B, H, WC)


def _band_weights(w_oihw, W, Cp):
    """3x3 conv weights (O, I, 3, 3) -> stacked banded matrix (3*W*Cp, W*Cp).

    Zero-padded conv along W becomes
        concat([rows_{h-1}, rows_h, rows_{h+1}], axis=-1) @ band_stacked
    with rows_* the (B*H, W*Cp) activation slabs.  Channels are zero-padded
    to Cp so the lane dim is a whole number of 128-lane vregs."""
    O, I, KH, KW = w_oihw.shape
    w_p = jnp.zeros((Cp, Cp, KH, KW), w_oihw.dtype).at[:O, :I].set(w_oihw)
    w_k = jnp.transpose(w_p, (2, 3, 1, 0))               # (kh, kw, I, O)
    win = jnp.arange(W)
    dw = win[:, None] - win[None, :] + 1                  # w_in - w_out + 1
    valid = (dw >= 0) & (dw <= 2)                         # W-boundary zero pad
    blocks = w_k[:, jnp.clip(dw, 0, 2)]                   # (3, Win, Wout, I, O)
    blocks = blocks * valid[None, :, :, None, None].astype(w_k.dtype)
    band = jnp.transpose(blocks, (0, 1, 3, 2, 4)).reshape(KH, W * Cp, W * Cp)
    return band.reshape(KH * W * Cp, W * Cp)


def _row_shift_operators(B, H):
    """0/1 matrices over the flattened (B*H) row axis picking the row above /
    below within the same image (rows at image borders map to zero)."""
    M = B * H
    m = jnp.arange(M)
    h = m % H
    pick_above = (m[:, None] == m[None, :] + 1) & (h[:, None] > 0)
    pick_below = (m[:, None] == m[None, :] - 1) & (h[:, None] < H - 1)
    return pick_above.astype(jnp.float32), pick_below.astype(jnp.float32)


def shortcut_block(x_nchw, w1, b1, w2, b2):
    """ShortcutBlock forward: x + conv2(relu(conv1(x))).

    x_nchw: (B, C, H, W).  w1/w2: (C, C, 3, 3) PyTorch OIHW.  b1/b2: (C,).
    """
    B, C, H, W = x_nchw.shape

    # Pad channels so the minor (lane) dim W*Cp is a multiple of 128: full-lane
    # loads/VPU work and unmasked output stores.  The padded channels are zero
    # in x / weights / bias, so the first C output channels are unchanged.
    Cp = C
    while (W * Cp) % 128 != 0:
        Cp += 1
    WC = W * Cp
    # NOTE: the dense banded-weight trick only makes sense while WC stays near
    # the MXU tile (<=128 on v5e, <=256 on v6e/v7x); past that, switch to
    # W-blocked tiles with a halo instead of a (3*WC, WC) band.

    # Layout prep (cheap XLA ops; the PyTorch API boundary stays NCHW).
    x_rows = jnp.transpose(x_nchw, (0, 2, 3, 1)).astype(jnp.float32)  # (B,H,W,C)
    x_rows = jnp.pad(x_rows, ((0, 0), (0, 0), (0, 0), (0, Cp - C)))
    x_rows = x_rows.reshape(B, H, WC)       # no H pad: halo handled in-kernel

    w1b = _band_weights(w1.astype(jnp.float32), W, Cp)    # (3*WC, WC)
    w2b = _band_weights(w2.astype(jnp.float32), W, Cp)
    b1r = jnp.tile(jnp.pad(b1.astype(jnp.float32), (0, Cp - C)), W)[None, :]
    b2r = jnp.tile(jnp.pad(b2.astype(jnp.float32), (0, Cp - C)), W)[None, :]
    sdn, sup = _row_shift_operators(B, H)                 # (M, M) each

    M = B * H
    # TODO(synk): at production sizes, grid over batch / H row-blocks with
    # dimension_semantics=("parallel", ...) (v7x has 2 TensorCores), keep the
    # band weights resident via a constant index_map, re-budget tiles for
    # v7x's 64 MiB VMEM (vmem_limit_bytes), and consider bf16 activations /
    # bands on v6e/v7x if the accuracy budget allows (kept f32 here to hold
    # the 1e-4 check against the f32 reference).
    out_rows = pl.pallas_call(
        _shortcut_kernel,
        out_shape=jax.ShapeDtypeStruct((B, H, WC), jnp.float32),
        grid=(1,),                    # whole (tiny) batch resident in one step
        in_specs=[
            pl.BlockSpec((B, H, WC), lambda i: (0, 0, 0)),
            pl.BlockSpec((M, M), lambda i: (0, 0)),
            pl.BlockSpec((M, M), lambda i: (0, 0)),
            pl.BlockSpec((3 * WC, WC), lambda i: (0, 0)),
            pl.BlockSpec((1, WC), lambda i: (0, 0)),
            pl.BlockSpec((3 * WC, WC), lambda i: (0, 0)),
            pl.BlockSpec((1, WC), lambda i: (0, 0)),
        ],
        out_specs=pl.BlockSpec((B, H, WC), lambda i: (0, 0, 0)),
        compiler_params=pltpu.CompilerParams(
            dimension_semantics=("arbitrary",)),
    )(x_rows, sdn, sup, w1b, b1r, w2b, b2r)

    out = out_rows.reshape(B, H, W, Cp)[..., :C]
    return jnp.transpose(out, (0, 3, 1, 2))


def _reference(x, w1, b1, w2, b2):
    dn = ('NCHW', 'OIHW', 'NCHW')
    h = jax.lax.conv_general_dilated(x, w1, (1, 1), 'SAME', dimension_numbers=dn)
    h = jax.nn.relu(h + b1[None, :, None, None])
    y = jax.lax.conv_general_dilated(h, w2, (1, 1), 'SAME', dimension_numbers=dn)
    y = y + b2[None, :, None, None]
    return x + y


if __name__ == "__main__":
    key = jax.random.PRNGKey(0)
    kx, k1, k2, k3, k4 = jax.random.split(key, 5)
    B, C, H, W = 2, 4, 16, 16

    x = jax.random.normal(kx, (B, C, H, W), jnp.float32)
    w1 = jax.random.normal(k1, (C, C, 3, 3), jnp.float32) * 0.1
    b1 = jax.random.normal(k2, (C,), jnp.float32) * 0.1
    w2 = jax.random.normal(k3, (C, C, 3, 3), jnp.float32) * 0.1
    b2 = jax.random.normal(k4, (C,), jnp.float32) * 0.1

    out = shortcut_block(x, w1, b1, w2, b2)
    jax.block_until_ready(out)

    ref = _reference(x, w1, b1, w2, b2)
    assert out.shape == (B, C, H, W)
    assert jnp.allclose(out, ref, rtol=1e-4, atol=1e-4), "mismatch vs reference"
    print("KERNEL_OK")
</pallas_src>

<mosaic_0001>
module attributes {stable_mosaic.version = 11 : i64} {
  func.func @_shortcut_kernel(%arg0: i32, %arg1: memref<2x16x128xf32, #tpu.memory_space<vmem>>, %arg2: memref<32x32xf32, #tpu.memory_space<vmem>>, %arg3: memref<32x32xf32, #tpu.memory_space<vmem>>, %arg4: memref<384x128xf32, #tpu.memory_space<vmem>>, %arg5: memref<1x128xf32, #tpu.memory_space<vmem>>, %arg6: memref<384x128xf32, #tpu.memory_space<vmem>>, %arg7: memref<1x128xf32, #tpu.memory_space<vmem>>, %arg8: memref<2x16x128xf32, #tpu.memory_space<vmem>>) attributes {dimension_semantics = [#tpu.dimension_semantics<arbitrary>], iteration_bounds = array<i64: 1>, scalar_prefetch = 0 : i64, scratch_operands = 0 : i64, tpu.core_type = #tpu.core_type<tc>, window_params = [{pipeline_mode = #tpu.pipeline_mode<synchronous>, transform_indices = @transform_0, window_bounds = array<i64: 2, 16, 128>}, {pipeline_mode = #tpu.pipeline_mode<synchronous>, transform_indices = @transform_1, window_bounds = array<i64: 32, 32>}, {pipeline_mode = #tpu.pipeline_mode<synchronous>, transform_indices = @transform_2, window_bounds = array<i64: 32, 32>}, {pipeline_mode = #tpu.pipeline_mode<synchronous>, transform_indices = @transform_3, window_bounds = array<i64: 384, 128>}, {pipeline_mode = #tpu.pipeline_mode<synchronous>, transform_indices = @transform_4, window_bounds = array<i64: 1, 128>}, {pipeline_mode = #tpu.pipeline_mode<synchronous>, transform_indices = @transform_5, window_bounds = array<i64: 384, 128>}, {pipeline_mode = #tpu.pipeline_mode<synchronous>, transform_indices = @transform_6, window_bounds = array<i64: 1, 128>}, {pipeline_mode = #tpu.pipeline_mode<synchronous>, transform_indices = @transform_7, window_bounds = array<i64: 2, 16, 128>}]} {
    %c0 = arith.constant 0 : index
    %c0_0 = arith.constant 0 : index
    %c0_1 = arith.constant 0 : index
    %0 = vector.load %arg1[%c0, %c0_0, %c0_1] : memref<2x16x128xf32, #tpu.memory_space<vmem>>, vector<2x16x128xf32>
    %1 = vector.shape_cast %0 : vector<2x16x128xf32> to vector<32x128xf32>
    %c0_2 = arith.constant 0 : index
    %c0_3 = arith.constant 0 : index
    %2 = vector.load %arg2[%c0_2, %c0_3] : memref<32x32xf32, #tpu.memory_space<vmem>>, vector<32x32xf32>
    %c0_4 = arith.constant 0 : index
    %c0_5 = arith.constant 0 : index
    %3 = vector.load %arg3[%c0_4, %c0_5] : memref<32x32xf32, #tpu.memory_space<vmem>>, vector<32x32xf32>
    %cst = arith.constant dense<0.000000e+00> : vector<32x128xf32>
    %4 = tpu.matmul %2, %1, %cst {dimension_numbers = #tpu.dot_dimension_numbers<[1], [0], [0], [1], [0, 0, 1, 1], [], []>} : vector<32x32xf32>, vector<32x128xf32>, vector<32x128xf32> -> vector<32x128xf32>
    %cst_6 = arith.constant dense<0.000000e+00> : vector<32x128xf32>
    %5 = tpu.matmul %3, %1, %cst_6 {dimension_numbers = #tpu.dot_dimension_numbers<[1], [0], [0], [1], [0, 0, 1, 1], [], []>} : vector<32x32xf32>, vector<32x128xf32>, vector<32x128xf32> -> vector<32x128xf32>
    %6 = tpu.concatenate %4, %1, %5 in 1 : vector<32x128xf32>, vector<32x128xf32>, vector<32x128xf32> -> vector<32x384xf32>
    %c0_7 = arith.constant 0 : index
    %c0_8 = arith.constant 0 : index
    %7 = vector.load %arg4[%c0_7, %c0_8] : memref<384x128xf32, #tpu.memory_space<vmem>>, vector<384x128xf32>
    %cst_9 = arith.constant dense<0.000000e+00> : vector<32x128xf32>
    %8 = tpu.matmul %6, %7, %cst_9 {dimension_numbers = #tpu.dot_dimension_numbers<[1], [0], [0], [1], [0, 0, 1, 1], [], []>} : vector<32x384xf32>, vector<384x128xf32>, vector<32x128xf32> -> vector<32x128xf32>
    %c0_10 = arith.constant 0 : index
    %c0_11 = arith.constant 0 : index
    %9 = vector.load %arg5[%c0_10, %c0_11] : memref<1x128xf32, #tpu.memory_space<vmem>>, vector<1x128xf32>
    %10 = vector.broadcast %9 : vector<1x128xf32> to vector<32x128xf32>
    %11 = arith.addf %8, %10 : vector<32x128xf32>
    %cst_12 = arith.constant 0.000000e+00 : f32
    %12 = vector.broadcast %cst_12 : f32 to vector<32x128xf32>
    %13 = arith.maximumf %11, %12 : vector<32x128xf32>
    %cst_13 = arith.constant dense<0.000000e+00> : vector<32x128xf32>
    %14 = tpu.matmul %2, %13, %cst_13 {dimension_numbers = #tpu.dot_dimension_numbers<[1], [0], [0], [1], [0, 0, 1, 1], [], []>} : vector<32x32xf32>, vector<32x128xf32>, vector<32x128xf32> -> vector<32x128xf32>
    %cst_14 = arith.constant dense<0.000000e+00> : vector<32x128xf32>
    %15 = tpu.matmul %3, %13, %cst_14 {dimension_numbers = #tpu.dot_dimension_numbers<[1], [0], [0], [1], [0, 0, 1, 1], [], []>} : vector<32x32xf32>, vector<32x128xf32>, vector<32x128xf32> -> vector<32x128xf32>
    %16 = tpu.concatenate %14, %13, %15 in 1 : vector<32x128xf32>, vector<32x128xf32>, vector<32x128xf32> -> vector<32x384xf32>
    %c0_15 = arith.constant 0 : index
    %c0_16 = arith.constant 0 : index
    %17 = vector.load %arg6[%c0_15, %c0_16] : memref<384x128xf32, #tpu.memory_space<vmem>>, vector<384x128xf32>
    %cst_17 = arith.constant dense<0.000000e+00> : vector<32x128xf32>
    %18 = tpu.matmul %16, %17, %cst_17 {dimension_numbers = #tpu.dot_dimension_numbers<[1], [0], [0], [1], [0, 0, 1, 1], [], []>} : vector<32x384xf32>, vector<384x128xf32>, vector<32x128xf32> -> vector<32x128xf32>
    %c0_18 = arith.constant 0 : index
    %c0_19 = arith.constant 0 : index
    %19 = vector.load %arg7[%c0_18, %c0_19] : memref<1x128xf32, #tpu.memory_space<vmem>>, vector<1x128xf32>
    %20 = vector.broadcast %19 : vector<1x128xf32> to vector<32x128xf32>
    %21 = arith.addf %18, %20 : vector<32x128xf32>
    %22 = arith.addf %1, %21 : vector<32x128xf32>
    %23 = vector.shape_cast %22 : vector<32x128xf32> to vector<2x16x128xf32>
    %c0_20 = arith.constant 0 : index
    %c0_21 = arith.constant 0 : index
    %c0_22 = arith.constant 0 : index
    %24 = vector.load %arg8[%c0_20, %c0_21, %c0_22] : memref<2x16x128xf32, #tpu.memory_space<vmem>>, vector<2x16x128xf32>
    tpu.vector_store %arg8[%c0_20, %c0_21, %c0_22], %23 {strides = array<i32>} : memref<2x16x128xf32, #tpu.memory_space<vmem>>, vector<2x16x128xf32>,
    return
  }
  func.func @transform_0(%arg0: i32) -> (i32, i32, i32) {
    %c0_i32 = arith.constant 0 : i32
    %c0_i32_0 = arith.constant 0 : i32
    %c0_i32_1 = arith.constant 0 : i32
    %c0_i32_2 = arith.constant 0 : i32
    return %c0_i32, %c0_i32_0, %c0_i32_1 : i32, i32, i32
  }
  func.func @transform_1(%arg0: i32) -> (i32, i32) {
    %c0_i32 = arith.constant 0 : i32
    %c0_i32_0 = arith.constant 0 : i32
    %c0_i32_1 = arith.constant 0 : i32
    return %c0_i32, %c0_i32_0 : i32, i32
  }
  func.func @transform_2(%arg0: i32) -> (i32, i32) {
    %c0_i32 = arith.constant 0 : i32
    %c0_i32_0 = arith.constant 0 : i32
    %c0_i32_1 = arith.constant 0 : i32
    return %c0_i32, %c0_i32_0 : i32, i32
  }
  func.func @transform_3(%arg0: i32) -> (i32, i32) {
    %c0_i32 = arith.constant 0 : i32
    %c0_i32_0 = arith.constant 0 : i32
    %c0_i32_1 = arith.constant 0 : i32
    return %c0_i32, %c0_i32_0 : i32, i32
  }
  func.func @transform_4(%arg0: i32) -> (i32, i32) {
    %c0_i32 = arith.constant 0 : i32
    %c0_i32_0 = arith.constant 0 : i32
    %c0_i32_1 = arith.constant 0 : i32
    return %c0_i32, %c0_i32_0 : i32, i32
  }
  func.func @transform_5(%arg0: i32) -> (i32, i32) {
    %c0_i32 = arith.constant 0 : i32
    %c0_i32_0 = arith.constant 0 : i32
    %c0_i32_1 = arith.constant 0 : i32
    return %c0_i32, %c0_i32_0 : i32, i32
  }
  func.func @transform_6(%arg0: i32) -> (i32, i32) {
    %c0_i32 = arith.constant 0 : i32
    %c0_i32_0 = arith.constant 0 : i32
    %c0_i32_1 = arith.constant 0 : i32
    return %c0_i32, %c0_i32_0 : i32, i32
  }
  func.func @transform_7(%arg0: i32) -> (i32, i32, i32) {
    %c0_i32 = arith.constant 0 : i32
    %c0_i32_0 = arith.constant 0 : i32
    %c0_i32_1 = arith.constant 0 : i32
    %c0_i32_2 = arith.constant 0 : i32
    return %c0_i32, %c0_i32_0, %c0_i32_1 : i32, i32, i32
  }
}

</mosaic_0001>

<llo_original>
// kernel: tpu_custom_call.1
$region0: #{tpu_custom_call.1}
  #allocation0 [shape = 'u32[]', space=smem, size = 0x4, offset = 0x4, fixed_abs, tag = 'smem constant byte address 0x4 - core index']
  #allocation1 [shape = 'u32[72,128]{1,0:T(1,128)}', space=vmem, size = 0x9000, scoped, tag = 'internal scratch']
  %s0 = inlined_call_operand.hbm [shape: f32[2,16,128], index: 0, kind: input, shape index: {}]
  %s1 = inlined_call_operand.hbm [shape: f32[32,32], index: 1, kind: input, shape index: {}]
  %s2 = inlined_call_operand.hbm [shape: f32[32,32], index: 2, kind: input, shape index: {}]
  %s3 = inlined_call_operand.hbm [shape: f32[384,128], index: 3, kind: input, shape index: {}]
  %s4 = inlined_call_operand.vmem [shape: f32[1,128], index: 4, kind: input, shape index: {}]
  %s5 = inlined_call_operand.hbm [shape: f32[384,128], index: 5, kind: input, shape index: {}]
  %s6 = inlined_call_operand.vmem [shape: f32[1,128], index: 6, kind: input, shape index: {}]
  %s7 = inlined_call_operand.hbm [shape: f32[2,16,128], index: 7, kind: output, shape index: {}]
  %s8 = sld [smem:[#allocation0]]
  $region58: #{tpu_custom_call.1} parent=0
    _
  %s10 = ssub.s32 1, %s8
  %s11 = scalar_select 0, %s10, %s8
  $region1: #{tpu_custom_call.1} parent=0
    #allocation2 [shape = 'u8[16384]{0}', space=vmem, size = 0x4000, scoped, tag = 'input window, operand 0, single buffered']
    #allocation3 [shape = 's32[1]{0}', space=sflag, size = 0x4, scoped, tag = 'scoped memory for tpu_custom_call.1']
    #allocation4 [shape = 's32[1]{0}', space=sflag, size = 0x4, scoped, tag = 'scoped memory for tpu_custom_call.1']
    #allocation5 [shape = 'u8[16384]{0}', space=vmem, size = 0x4000, scoped, tag = 'input window, operand 1, single buffered']
    #allocation6 [shape = 's32[1]{0}', space=sflag, size = 0x4, scoped, tag = 'scoped memory for tpu_custom_call.1']
    #allocation7 [shape = 'u8[16384]{0}', space=vmem, size = 0x4000, scoped, tag = 'input window, operand 2, single buffered']
    #allocation8 [shape = 'u8[196608]{0}', space=vmem, size = 0x30000, scoped, tag = 'input window, operand 3, single buffered']
    #allocation9 [shape = 's32[1]{0}', space=sflag, size = 0x4, scoped, tag = 'scoped memory for tpu_custom_call.1']
    #allocation10 [shape = 'u8[196608]{0}', space=vmem, size = 0x30000, scoped, tag = 'input window, operand 5, single buffered']
    #allocation11 [shape = 'u8[16384]{0}', space=vmem, size = 0x4000, scoped, tag = 'output window, operand 0, single buffered']
    %12 = vsyncpa [#allocation3], 0
    %13 = vsyncpa [#allocation6], 0
    %14 = vsyncpa [#allocation9], 0
    %15 = vsyncpa [#allocation4], 0
    // Predicated region
    $region2: #{tpu_custom_call.1} parent=1 // pred_check
      _
    $region3: #{tpu_custom_call.1} parent=1 // pred_check_branch
      %17 = sbr.rel (0) target = $region5
    $region4: #{tpu_custom_call.1} parent=1 // pred_region
      %19 = vsyncadd [#allocation3], 0
      %s20 = sshll.u32 %s0, 4
      %s21 = int_to_ptr.hbm [resolvable:$true] %s20
      %s22 = sshll.u32 [#allocation2], 4
      %s23 = int_to_ptr.vmem [resolvable:$true] %s22
      %28 = dma.hbm_to_vmem [thread:$0]  %s21, 512, %s23, [#allocation3], 128, 128, 8
    $region5: #{tpu_custom_call.1} parent=1 // pred_fallthru
      _
    // Predicated region
    $region6: #{tpu_custom_call.1} parent=1 // pred_check
      _
    $region7: #{tpu_custom_call.1} parent=1 // pred_check_branch
      %30 = sbr.rel (0) target = $region9
    $region8: #{tpu_custom_call.1} parent=1 // pred_region
      %32 = vsyncadd [#allocation6], 0
      %s33 = sshll.u32 %s1, 4
      %s34 = int_to_ptr.hbm [resolvable:$true] %s33
      %s35 = sshll.u32 [#allocation5], 4
      %s36 = int_to_ptr.vmem [resolvable:$true] %s35
      %41 = dma.hbm_to_vmem [thread:$0]  %s34, 512, %s36, [#allocation6], 128, 128, 8
    $region9: #{tpu_custom_call.1} parent=1 // pred_fallthru
      _
    // Predicated region
    $region10: #{tpu_custom_call.1} parent=1 // pred_check
      _
    $region11: #{tpu_custom_call.1} parent=1 // pred_check_branch
      %43 = sbr.rel (0) target = $region13
    $region12: #{tpu_custom_call.1} parent=1 // pred_region
      %45 = vsyncadd [#allocation6], 0
      %s46 = sshll.u32 %s2, 4
      %s47 = int_to_ptr.hbm [resolvable:$true] %s46
      %s48 = sshll.u32 [#allocation7], 4
      %s49 = int_to_ptr.vmem [resolvable:$true] %s48
      %54 = dma.hbm_to_vmem [thread:$0]  %s47, 512, %s49, [#allocation6], 128, 128, 8
    $region13: #{tpu_custom_call.1} parent=1 // pred_fallthru
      _
    // Predicated region
    $region14: #{tpu_custom_call.1} parent=1 // pred_check
      _
    $region15: #{tpu_custom_call.1} parent=1 // pred_check_branch
      %56 = sbr.rel (0) target = $region17
    $region16: #{tpu_custom_call.1} parent=1 // pred_region
      %58 = vsyncadd [#allocation9], 0
      %s59 = sshll.u32 %s3, 4
      %s60 = int_to_ptr.hbm [resolvable:$true] %s59
      %s61 = sshll.u32 [#allocation8], 4
      %s62 = int_to_ptr.vmem [resolvable:$true] %s61
      %67 = dma.hbm_to_vmem [thread:$0]  %s60, 6144, %s62, [#allocation9], 128, 128, 8
    $region17: #{tpu_custom_call.1} parent=1 // pred_fallthru
      _
    // Predicated region
    $region18: #{tpu_custom_call.1} parent=1 // pred_check
      _
    $region19: #{tpu_custom_call.1} parent=1 // pred_check_branch
      %69 = sbr.rel (0) target = $region21
    $region20: #{tpu_custom_call.1} parent=1 // pred_region
      _
    $region21: #{tpu_custom_call.1} parent=1 // pred_fallthru
      _
    // Predicated region
    $region22: #{tpu_custom_call.1} parent=1 // pred_check
      _
    $region23: #{tpu_custom_call.1} parent=1 // pred_check_branch
      %71 = sbr.rel (0) target = $region25
    $region24: #{tpu_custom_call.1} parent=1 // pred_region
      %73 = vsyncadd [#allocation9], 0
      %s74 = sshll.u32 %s5, 4
      %s75 = int_to_ptr.hbm [resolvable:$true] %s74
      %s76 = sshll.u32 [#allocation10], 4
      %s77 = int_to_ptr.vmem [resolvable:$true] %s76
      %82 = dma.hbm_to_vmem [thread:$0]  %s75, 6144, %s77, [#allocation9], 128, 128, 8
    $region25: #{tpu_custom_call.1} parent=1 // pred_fallthru
      _
    // Predicated region
    $region26: #{tpu_custom_call.1} parent=1 // pred_check
      _
    $region27: #{tpu_custom_call.1} parent=1 // pred_check_branch
      %84 = sbr.rel (0) target = $region29
    $region28: #{tpu_custom_call.1} parent=1 // pred_region
      _
    $region29: #{tpu_custom_call.1} parent=1 // pred_fallthru
      _
    // Predicated region
    $region30: #{tpu_custom_call.1} parent=1 // pred_check
      _
    $region31: #{tpu_custom_call.1} parent=1 // pred_check_branch
      %86 = sbr.rel (0) target = $region33
    $region32: #{tpu_custom_call.1} parent=1 // pred_region
      %88 = dma.done [#allocation3], 512
    $region33: #{tpu_custom_call.1} parent=1 // pred_fallthru
      _
    // Predicated region
    $region34: #{tpu_custom_call.1} parent=1 // pred_check
      _
    $region35: #{tpu_custom_call.1} parent=1 // pred_check_branch
      %90 = sbr.rel (0) target = $region37
    $region36: #{tpu_custom_call.1} parent=1 // pred_region
      %92 = dma.done [#allocation6], 512
    $region37: #{tpu_custom_call.1} parent=1 // pred_fallthru
      _
    // Predicated region
    $region38: #{tpu_custom_call.1} parent=1 // pred_check
      _
    $region39: #{tpu_custom_call.1} parent=1 // pred_check_branch
      %94 = sbr.rel (0) target = $region41
    $region40: #{tpu_custom_call.1} parent=1 // pred_region
      %96 = dma.done [#allocation6], 512
    $region41: #{tpu_custom_call.1} parent=1 // pred_fallthru
      _
    // Predicated region
    $region42: #{tpu_custom_call.1} parent=1 // pred_check
      _
    $region43: #{tpu_custom_call.1} parent=1 // pred_check_branch
      %98 = sbr.rel (0) target = $region45
    $region44: #{tpu_custom_call.1} parent=1 // pred_region
      %100 = dma.done [#allocation9], 6144
    $region45: #{tpu_custom_call.1} parent=1 // pred_fallthru
      _
    // Predicated region
    $region46: #{tpu_custom_call.1} parent=1 // pred_check
      _
    $region47: #{tpu_custom_call.1} parent=1 // pred_check_branch
      %102 = sbr.rel (0) target = $region49
    $region48: #{tpu_custom_call.1} parent=1 // pred_region
      %104 = dma.done [#allocation9], 6144
    $region49: #{tpu_custom_call.1} parent=1 // pred_fallthru
      _
    %v105 = vld [vmem:[#allocation2] sm:$0xff]
    %v106 = vld [vmem:[#allocation2 + $0x8] sm:$0xff]
    %v107 = vld [vmem:[#allocation2 + $0x10] sm:$0xff]
    %v108 = vld [vmem:[#allocation2 + $0x18] sm:$0xff]
    %v109 = vld [vmem:[#allocation5] sm:$0xff]
    %v110 = vld [vmem:[#allocation5 + $0x8] sm:$0xff]
    %v111 = vld [vmem:[#allocation5 + $0x10] sm:$0xff]
    %v112 = vld [vmem:[#allocation5 + $0x18] sm:$0xff]
    %v113 = vld [vmem:[#allocation7] sm:$0xff]
    %v114 = vld [vmem:[#allocation7 + $0x8] sm:$0xff]
    %v115 = vld [vmem:[#allocation7 + $0x10] sm:$0xff]
    %v116 = vld [vmem:[#allocation7 + $0x18] sm:$0xff]
    %vm117 = vcmask 261120
    %v119 = vsel %vm117, %v109, 0
    %v122 = vsel %vm117, %v110, 0
    %v125 = vsel %vm117, %v111, 0
    %v128 = vsel %vm117, %v112, 0
    %130 = vmatpush.msra.mxu0 0.0
    %131 = vmatpush.msra.mxu0 0.0
    %132 = vmatpush.msra.mxu0 0.0
    %133 = vmatpush.msra.mxu0 0.0
    %134 = vmatpush.msra.mxu0 0.0
    %135 = vmatpush.msra.mxu0 0.0
    %136 = vmatpush.msra.mxu0 0.0
    %137 = vmatpush.msra.mxu0 0.0
    %138 = vmatpush.msra.mxu0 0.0
    %139 = vmatpush.msra.mxu0 0.0
    %140 = vmatpush.msra.mxu0 0.0
    %141 = vmatpush.msra.mxu0 0.0
    %142 = vmatpush.msra.mxu0 %v108
    %143 = vmatpush.msra.mxu0 %v107
    %144 = vmatpush.msra.mxu0 %v106
    %145 = vmatpush.msra.mxu0 %v105
    %146 = vmatmul.f32.gmra.mxu0 %v119
    %v147 = vpop.f32.mrf.mxu0
    %v148 = vadd.f32 0.0, %v147
    %149 = vmatmul.f32.gmra.mxu0 %v122
    %v150 = vpop.f32.mrf.mxu0
    %v151 = vadd.f32 0.0, %v150
    %152 = vmatmul.f32.gmra.mxu0 %v125
    %v153 = vpop.f32.mrf.mxu0
    %v154 = vadd.f32 0.0, %v153
    %155 = vmatmul.f32.gmra.mxu0 %v128
    %v156 = vpop.f32.mrf.mxu0
    %v157 = vadd.f32 0.0, %v156
    %158 = vdwg.mxu0
    %v160 = vsel %vm117, %v113, 0
    %v163 = vsel %vm117, %v114, 0
    %v166 = vsel %vm117, %v115, 0
    %v169 = vsel %vm117, %v116, 0
    %171 = vmatpush.msra.mxu0 0.0
    %172 = vmatpush.msra.mxu0 0.0
    %173 = vmatpush.msra.mxu0 0.0
    %174 = vmatpush.msra.mxu0 0.0
    %175 = vmatpush.msra.mxu0 0.0
    %176 = vmatpush.msra.mxu0 0.0
    %177 = vmatpush.msra.mxu0 0.0
    %178 = vmatpush.msra.mxu0 0.0
    %179 = vmatpush.msra.mxu0 0.0
    %180 = vmatpush.msra.mxu0 0.0
    %181 = vmatpush.msra.mxu0 0.0
    %182 = vmatpush.msra.mxu0 0.0
    %183 = vmatpush.msra.mxu0 %v108
    %184 = vmatpush.msra.mxu0 %v107
    %185 = vmatpush.msra.mxu0 %v106
    %186 = vmatpush.msra.mxu0 %v105
    %187 = vmatmul.f32.gmra.mxu0 %v160
    %v188 = vpop.f32.mrf.mxu0
    %v189 = vadd.f32 0.0, %v188
    %190 = vmatmul.f32.gmra.mxu0 %v163
    %v191 = vpop.f32.mrf.mxu0
    %v192 = vadd.f32 0.0, %v191
    %193 = vmatmul.f32.gmra.mxu0 %v166
    %v194 = vpop.f32.mrf.mxu0
    %v195 = vadd.f32 0.0, %v194
    %196 = vmatmul.f32.gmra.mxu0 %v169
    %v197 = vpop.f32.mrf.mxu0
    %v198 = vadd.f32 0.0, %v197
    %199 = vdwg.mxu0
    %v200 = vld [vmem:[#allocation8] sm:$0xff]
    %v201 = vld [vmem:[#allocation8 + $0x8] sm:$0xff]
    %v202 = vld [vmem:[#allocation8 + $0x10] sm:$0xff]
    %v203 = vld [vmem:[#allocation8 + $0x18] sm:$0xff]
    %v204 = vld [vmem:[#allocation8 + $0x20] sm:$0xff]
    %v205 = vld [vmem:[#allocation8 + $0x28] sm:$0xff]
    %v206 = vld [vmem:[#allocation8 + $0x30] sm:$0xff]
    %v207 = vld [vmem:[#allocation8 + $0x38] sm:$0xff]
    %v208 = vld [vmem:[#allocation8 + $0x40] sm:$0xff]
    %v209 = vld [vmem:[#allocation8 + $0x48] sm:$0xff]
    %v210 = vld [vmem:[#allocation8 + $0x50] sm:$0xff]
    %v211 = vld [vmem:[#allocation8 + $0x58] sm:$0xff]
    %v212 = vld [vmem:[#allocation8 + $0x60] sm:$0xff]
    %v213 = vld [vmem:[#allocation8 + $0x68] sm:$0xff]
    %v214 = vld [vmem:[#allocation8 + $0x70] sm:$0xff]
    %v215 = vld [vmem:[#allocation8 + $0x78] sm:$0xff]
    %v216 = vld [vmem:[#allocation8 + $0x80] sm:$0xff]
    %v217 = vld [vmem:[#allocation8 + $0x88] sm:$0xff]
    %v218 = vld [vmem:[#allocation8 + $0x90] sm:$0xff]
    %v219 = vld [vmem:[#allocation8 + $0x98] sm:$0xff]
    %v220 = vld [vmem:[#allocation8 + $0xa0] sm:$0xff]
    %v221 = vld [vmem:[#allocation8 + $0xa8] sm:$0xff]
    %v222 = vld [vmem:[#allocation8 + $0xb0] sm:$0xff]
    %v223 = vld [vmem:[#allocation8 + $0xb8] sm:$0xff]
    %v224 = vld [vmem:[#allocation8 + $0xc0] sm:$0xff]
    %v225 = vld [vmem:[#allocation8 + $0xc8] sm:$0xff]
    %v226 = vld [vmem:[#allocation8 + $0xd0] sm:$0xff]
    %v227 = vld [vmem:[#allocation8 + $0xd8] sm:$0xff]
    %v228 = vld [vmem:[#allocation8 + $0xe0] sm:$0xff]
    %v229 = vld [vmem:[#allocation8 + $0xe8] sm:$0xff]
    %v230 = vld [vmem:[#allocation8 + $0xf0] sm:$0xff]
    %v231 = vld [vmem:[#allocation8 + $0xf8] sm:$0xff]
    %v232 = vld [vmem:[#allocation8 + $0x100] sm:$0xff]
    %v233 = vld [vmem:[#allocation8 + $0x108] sm:$0xff]
    %v234 = vld [vmem:[#allocation8 + $0x110] sm:$0xff]
    %v235 = vld [vmem:[#allocation8 + $0x118] sm:$0xff]
    %v236 = vld [vmem:[#allocation8 + $0x120] sm:$0xff]
    %v237 = vld [vmem:[#allocation8 + $0x128] sm:$0xff]
    %v238 = vld [vmem:[#allocation8 + $0x130] sm:$0xff]
    %v239 = vld [vmem:[#allocation8 + $0x138] sm:$0xff]
    %v240 = vld [vmem:[#allocation8 + $0x140] sm:$0xff]
    %v241 = vld [vmem:[#allocation8 + $0x148] sm:$0xff]
    %v242 = vld [vmem:[#allocation8 + $0x150] sm:$0xff]
    %v243 = vld [vmem:[#allocation8 + $0x158] sm:$0xff]
    %v244 = vld [vmem:[#allocation8 + $0x160] sm:$0xff]
    %v245 = vld [vmem:[#allocation8 + $0x168] sm:$0xff]
    %v246 = vld [vmem:[#allocation8 + $0x170] sm:$0xff]
    %v247 = vld [vmem:[#allocation8 + $0x178] sm:$0xff]
    %v248 = vld [vmem:[%s4] sm:$0x1]
    %v250 = vperm.slane %v248, 0
    %252 = vmatpush.msra.mxu0 %v215
    %253 = vmatpush.msra.mxu0 %v214
    %254 = vmatpush.msra.mxu0 %v213
    %255 = vmatpush.msra.mxu0 %v212
    %256 = vmatpush.msra.mxu0 %v211
    %257 = vmatpush.msra.mxu0 %v210
    %258 = vmatpush.msra.mxu0 %v209
    %259 = vmatpush.msra.mxu0 %v208
    %260 = vmatpush.msra.mxu0 %v207
    %261 = vmatpush.msra.mxu0 %v206
    %262 = vmatpush.msra.mxu0 %v205
    %263 = vmatpush.msra.mxu0 %v204
    %264 = vmatpush.msra.mxu0 %v203
    %265 = vmatpush.msra.mxu0 %v202
    %266 = vmatpush.msra.mxu0 %v201
    %267 = vmatpush.msra.mxu0 %v200
    %268 = vmatmul.f32.gmra.mxu0 %v148
    %v269 = vpop.f32.mrf.mxu0
    %v270 = vadd.f32 %v250, %v269
    %271 = vmatmul.f32.gmra.mxu0 %v151
    %v272 = vpop.f32.mrf.mxu0
    %v273 = vadd.f32 %v250, %v272
    %274 = vmatmul.f32.gmra.mxu0 %v154
    %v275 = vpop.f32.mrf.mxu0
    %v276 = vadd.f32 %v250, %v275
    %277 = vmatmul.f32.gmra.mxu0 %v157
    %v278 = vpop.f32.mrf.mxu0
    %v279 = vadd.f32 %v250, %v278
    %280 = vdwg.mxu0
    %281 = vmatpush.msra.mxu0 %v231
    %282 = vmatpush.msra.mxu0 %v230
    %283 = vmatpush.msra.mxu0 %v229
    %284 = vmatpush.msra.mxu0 %v228
    %285 = vmatpush.msra.mxu0 %v227
    %286 = vmatpush.msra.mxu0 %v226
    %287 = vmatpush.msra.mxu0 %v225
    %288 = vmatpush.msra.mxu0 %v224
    %289 = vmatpush.msra.mxu0 %v223
    %290 = vmatpush.msra.mxu0 %v222
    %291 = vmatpush.msra.mxu0 %v221
    %292 = vmatpush.msra.mxu0 %v220
    %293 = vmatpush.msra.mxu0 %v219
    %294 = vmatpush.msra.mxu0 %v218
    %295 = vmatpush.msra.mxu0 %v217
    %296 = vmatpush.msra.mxu0 %v216
    %297 = vmatmul.f32.gmra.mxu0 %v105
    %v298 = vpop.f32.mrf.mxu0
    %v299 = vadd.f32 %v270, %v298
    %300 = vmatmul.f32.gmra.mxu0 %v106
    %v301 = vpop.f32.mrf.mxu0
    %v302 = vadd.f32 %v273, %v301
    %303 = vmatmul.f32.gmra.mxu0 %v107
    %v304 = vpop.f32.mrf.mxu0
    %v305 = vadd.f32 %v276, %v304
    %306 = vmatmul.f32.gmra.mxu0 %v108
    %v307 = vpop.f32.mrf.mxu0
    %v308 = vadd.f32 %v279, %v307
    %309 = vdwg.mxu0
    %310 = vmatpush.msra.mxu0 %v247
    %311 = vmatpush.msra.mxu0 %v246
    %312 = vmatpush.msra.mxu0 %v245
    %313 = vmatpush.msra.mxu0 %v244
    %314 = vmatpush.msra.mxu0 %v243
    %315 = vmatpush.msra.mxu0 %v242
    %316 = vmatpush.msra.mxu0 %v241
    %317 = vmatpush.msra.mxu0 %v240
    %318 = vmatpush.msra.mxu0 %v239
    %319 = vmatpush.msra.mxu0 %v238
    %320 = vmatpush.msra.mxu0 %v237
    %321 = vmatpush.msra.mxu0 %v236
    %322 = vmatpush.msra.mxu0 %v235
    %323 = vmatpush.msra.mxu0 %v234
    %324 = vmatpush.msra.mxu0 %v233
    %325 = vmatpush.msra.mxu0 %v232
    %326 = vmatmul.f32.gmra.mxu0 %v189
    %v327 = vpop.f32.mrf.mxu0
    %v328 = vadd.f32 %v299, %v327
    %329 = vmatmul.f32.gmra.mxu0 %v192
    %v330 = vpop.f32.mrf.mxu0
    %v331 = vadd.f32 %v302, %v330
    %332 = vmatmul.f32.gmra.mxu0 %v195
    %v333 = vpop.f32.mrf.mxu0
    %v334 = vadd.f32 %v305, %v333
    %335 = vmatmul.f32.gmra.mxu0 %v198
    %v336 = vpop.f32.mrf.mxu0
    %v337 = vadd.f32 %v308, %v336
    %338 = vdwg.mxu0
    %v339 = vmax.f32 %v328, 0.0
    %v340 = vmax.f32 %v331, 0.0
    %v341 = vmax.f32 %v334, 0.0
    %v342 = vmax.f32 %v337, 0.0
    %343 = vmatpush.msra.mxu0 0.0
    %344 = vmatpush.msra.mxu0 0.0
    %345 = vmatpush.msra.mxu0 0.0
    %346 = vmatpush.msra.mxu0 0.0
    %347 = vmatpush.msra.mxu0 0.0
    %348 = vmatpush.msra.mxu0 0.0
    %349 = vmatpush.msra.mxu0 0.0
    %350 = vmatpush.msra.mxu0 0.0
    %351 = vmatpush.msra.mxu0 0.0
    %352 = vmatpush.msra.mxu0 0.0
    %353 = vmatpush.msra.mxu0 0.0
    %354 = vmatpush.msra.mxu0 0.0
    %355 = vmatpush.msra.mxu0 %v342
    %356 = vmatpush.msra.mxu0 %v341
    %357 = vmatpush.msra.mxu0 %v340
    %358 = vmatpush.msra.mxu0 %v339
    %359 = vmatmul.f32.gmra.mxu0 %v119
    %v360 = vpop.f32.mrf.mxu0
    %v361 = vadd.f32 0.0, %v360
    %362 = vmatmul.f32.gmra.mxu0 %v122
    %v363 = vpop.f32.mrf.mxu0
    %v364 = vadd.f32 0.0, %v363
    %365 = vmatmul.f32.gmra.mxu0 %v125
    %v366 = vpop.f32.mrf.mxu0
    %v367 = vadd.f32 0.0, %v366
    %368 = vmatmul.f32.gmra.mxu0 %v128
    %v369 = vpop.f32.mrf.mxu0
    %v370 = vadd.f32 0.0, %v369
    %371 = vdwg.mxu0
    %372 = vmatpush.msra.mxu0 0.0
    %373 = vmatpush.msra.mxu0 0.0
    %374 = vmatpush.msra.mxu0 0.0
    %375 = vmatpush.msra.mxu0 0.0
    %376 = vmatpush.msra.mxu0 0.0
    %377 = vmatpush.msra.mxu0 0.0
    %378 = vmatpush.msra.mxu0 0.0
    %379 = vmatpush.msra.mxu0 0.0
    %380 = vmatpush.msra.mxu0 0.0
    %381 = vmatpush.msra.mxu0 0.0
    %382 = vmatpush.msra.mxu0 0.0
    %383 = vmatpush.msra.mxu0 0.0
    %384 = vmatpush.msra.mxu0 %v342
    %385 = vmatpush.msra.mxu0 %v341
    %386 = vmatpush.msra.mxu0 %v340
    %387 = vmatpush.msra.mxu0 %v339
    %388 = vmatmul.f32.gmra.mxu0 %v160
    %v389 = vpop.f32.mrf.mxu0
    %v390 = vadd.f32 0.0, %v389
    %391 = vmatmul.f32.gmra.mxu0 %v163
    %v392 = vpop.f32.mrf.mxu0
    %v393 = vadd.f32 0.0, %v392
    %394 = vmatmul.f32.gmra.mxu0 %v166
    %v395 = vpop.f32.mrf.mxu0
    %v396 = vadd.f32 0.0, %v395
    %397 = vmatmul.f32.gmra.mxu0 %v169
    %v398 = vpop.f32.mrf.mxu0
    %v399 = vadd.f32 0.0, %v398
    %400 = vdwg.mxu0
    %v401 = vld [vmem:[#allocation10] sm:$0xff]
    %v402 = vld [vmem:[#allocation10 + $0x8] sm:$0xff]
    %v403 = vld [vmem:[#allocation10 + $0x10] sm:$0xff]
    %v404 = vld [vmem:[#allocation10 + $0x18] sm:$0xff]
    %v405 = vld [vmem:[#allocation10 + $0x20] sm:$0xff]
    %v406 = vld [vmem:[#allocation10 + $0x28] sm:$0xff]
    %v407 = vld [vmem:[#allocation10 + $0x30] sm:$0xff]
    %v408 = vld [vmem:[#allocation10 + $0x38] sm:$0xff]
    %v409 = vld [vmem:[#allocation10 + $0x40] sm:$0xff]
    %v410 = vld [vmem:[#allocation10 + $0x48] sm:$0xff]
    %v411 = vld [vmem:[#allocation10 + $0x50] sm:$0xff]
    %v412 = vld [vmem:[#allocation10 + $0x58] sm:$0xff]
    %v413 = vld [vmem:[#allocation10 + $0x60] sm:$0xff]
    %v414 = vld [vmem:[#allocation10 + $0x68] sm:$0xff]
    %v415 = vld [vmem:[#allocation10 + $0x70] sm:$0xff]
    %v416 = vld [vmem:[#allocation10 + $0x78] sm:$0xff]
    %v417 = vld [vmem:[#allocation10 + $0x80] sm:$0xff]
    %v418 = vld [vmem:[#allocation10 + $0x88] sm:$0xff]
    %v419 = vld [vmem:[#allocation10 + $0x90] sm:$0xff]
    %v420 = vld [vmem:[#allocation10 + $0x98] sm:$0xff]
    %v421 = vld [vmem:[#allocation10 + $0xa0] sm:$0xff]
    %v422 = vld [vmem:[#allocation10 + $0xa8] sm:$0xff]
    %v423 = vld [vmem:[#allocation10 + $0xb0] sm:$0xff]
    %v424 = vld [vmem:[#allocation10 + $0xb8] sm:$0xff]
    %v425 = vld [vmem:[#allocation10 + $0xc0] sm:$0xff]
    %v426 = vld [vmem:[#allocation10 + $0xc8] sm:$0xff]
    %v427 = vld [vmem:[#allocation10 + $0xd0] sm:$0xff]
    %v428 = vld [vmem:[#allocation10 + $0xd8] sm:$0xff]
    %v429 = vld [vmem:[#allocation10 + $0xe0] sm:$0xff]
    %v430 = vld [vmem:[#allocation10 + $0xe8] sm:$0xff]
    %v431 = vld [vmem:[#allocation10 + $0xf0] sm:$0xff]
    %v432 = vld [vmem:[#allocation10 + $0xf8] sm:$0xff]
    %v433 = vld [vmem:[#allocation10 + $0x100] sm:$0xff]
    %v434 = vld [vmem:[#allocation10 + $0x108] sm:$0xff]
    %v435 = vld [vmem:[#allocation10 + $0x110] sm:$0xff]
    %v436 = vld [vmem:[#allocation10 + $0x118] sm:$0xff]
    %v437 = vld [vmem:[#allocation10 + $0x120] sm:$0xff]
    %v438 = vld [vmem:[#allocation10 + $0x128] sm:$0xff]
    %v439 = vld [vmem:[#allocation10 + $0x130] sm:$0xff]
    %v440 = vld [vmem:[#allocation10 + $0x138] sm:$0xff]
    %v441 = vld [vmem:[#allocation10 + $0x140] sm:$0xff]
    %v442 = vld [vmem:[#allocation10 + $0x148] sm:$0xff]
    %v443 = vld [vmem:[#allocation10 + $0x150] sm:$0xff]
    %v444 = vld [vmem:[#allocation10 + $0x158] sm:$0xff]
    %v445 = vld [vmem:[#allocation10 + $0x160] sm:$0xff]
    %v446 = vld [vmem:[#allocation10 + $0x168] sm:$0xff]
    %v447 = vld [vmem:[#allocation10 + $0x170] sm:$0xff]
    %v448 = vld [vmem:[#allocation10 + $0x178] sm:$0xff]
    %v449 = vld [vmem:[%s6] sm:$0x1]
    %v451 = vperm.slane %v449, 0
    %453 = vmatpush.msra.mxu0 %v416
    %454 = vmatpush.msra.mxu0 %v415
    %455 = vmatpush.msra.mxu0 %v414
    %456 = vmatpush.msra.mxu0 %v413
    %457 = vmatpush.msra.mxu0 %v412
    %458 = vmatpush.msra.mxu0 %v411
    %459 = vmatpush.msra.mxu0 %v410
    %460 = vmatpush.msra.mxu0 %v409
    %461 = vmatpush.msra.mxu0 %v408
    %462 = vmatpush.msra.mxu0 %v407
    %463 = vmatpush.msra.mxu0 %v406
    %464 = vmatpush.msra.mxu0 %v405
    %465 = vmatpush.msra.mxu0 %v404
    %466 = vmatpush.msra.mxu0 %v403
    %467 = vmatpush.msra.mxu0 %v402
    %468 = vmatpush.msra.mxu0 %v401
    %469 = vmatmul.f32.gmra.mxu0 %v361
    %v470 = vpop.f32.mrf.mxu0
    %v471 = vadd.f32 %v451, %v470
    %472 = vmatmul.f32.gmra.mxu0 %v364
    %v473 = vpop.f32.mrf.mxu0
    %v474 = vadd.f32 %v451, %v473
    %475 = vmatmul.f32.gmra.mxu0 %v367
    %v476 = vpop.f32.mrf.mxu0
    %v477 = vadd.f32 %v451, %v476
    %478 = vmatmul.f32.gmra.mxu0 %v370
    %v479 = vpop.f32.mrf.mxu0
    %v480 = vadd.f32 %v451, %v479
    %481 = vdwg.mxu0
    %482 = vmatpush.msra.mxu0 %v432
    %483 = vmatpush.msra.mxu0 %v431
    %484 = vmatpush.msra.mxu0 %v430
    %485 = vmatpush.msra.mxu0 %v429
    %486 = vmatpush.msra.mxu0 %v428
    %487 = vmatpush.msra.mxu0 %v427
    %488 = vmatpush.msra.mxu0 %v426
    %489 = vmatpush.msra.mxu0 %v425
    %490 = vmatpush.msra.mxu0 %v424
    %491 = vmatpush.msra.mxu0 %v423
    %492 = vmatpush.msra.mxu0 %v422
    %493 = vmatpush.msra.mxu0 %v421
    %494 = vmatpush.msra.mxu0 %v420
    %495 = vmatpush.msra.mxu0 %v419
    %496 = vmatpush.msra.mxu0 %v418
    %497 = vmatpush.msra.mxu0 %v417
    %498 = vmatmul.f32.gmra.mxu0 %v339
    %v499 = vpop.f32.mrf.mxu0
    %v500 = vadd.f32 %v471, %v499
    %501 = vmatmul.f32.gmra.mxu0 %v340
    %v502 = vpop.f32.mrf.mxu0
    %v503 = vadd.f32 %v474, %v502
    %504 = vmatmul.f32.gmra.mxu0 %v341
    %v505 = vpop.f32.mrf.mxu0
    %v506 = vadd.f32 %v477, %v505
    %507 = vmatmul.f32.gmra.mxu0 %v342
    %v508 = vpop.f32.mrf.mxu0
    %v509 = vadd.f32 %v480, %v508
    %510 = vdwg.mxu0
    %511 = vmatpush.msra.mxu0 %v448
    %512 = vmatpush.msra.mxu0 %v447
    %513 = vmatpush.msra.mxu0 %v446
    %514 = vmatpush.msra.mxu0 %v445
    %515 = vmatpush.msra.mxu0 %v444
    %516 = vmatpush.msra.mxu0 %v443
    %517 = vmatpush.msra.mxu0 %v442
    %518 = vmatpush.msra.mxu0 %v441
    %519 = vmatpush.msra.mxu0 %v440
    %520 = vmatpush.msra.mxu0 %v439
    %521 = vmatpush.msra.mxu0 %v438
    %522 = vmatpush.msra.mxu0 %v437
    %523 = vmatpush.msra.mxu0 %v436
    %524 = vmatpush.msra.mxu0 %v435
    %525 = vmatpush.msra.mxu0 %v434
    %526 = vmatpush.msra.mxu0 %v433
    %527 = vmatmul.f32.gmra.mxu0 %v390
    %v528 = vpop.f32.mrf.mxu0
    %v529 = vadd.f32 %v500, %v528
    %530 = vmatmul.f32.gmra.mxu0 %v393
    %v531 = vpop.f32.mrf.mxu0
    %v532 = vadd.f32 %v503, %v531
    %533 = vmatmul.f32.gmra.mxu0 %v396
    %v534 = vpop.f32.mrf.mxu0
    %v535 = vadd.f32 %v506, %v534
    %536 = vmatmul.f32.gmra.mxu0 %v399
    %v537 = vpop.f32.mrf.mxu0
    %v538 = vadd.f32 %v509, %v537
    %539 = vdwg.mxu0
    %v540 = vadd.f32 %v105, %v529
    %v541 = vadd.f32 %v106, %v532
    %v542 = vadd.f32 %v107, %v535
    %v543 = vadd.f32 %v108, %v538
    %544 = vst [vmem:[#allocation11] sm:$0xff] %v540
    %545 = vst [vmem:[#allocation11 + $0x8] sm:$0xff] %v541
    %546 = vst [vmem:[#allocation11 + $0x10] sm:$0xff] %v542
    %547 = vst [vmem:[#allocation11 + $0x18] sm:$0xff] %v543
    // Predicated region
    $region50: #{tpu_custom_call.1} parent=1 // pred_check
      _
    $region51: #{tpu_custom_call.1} parent=1 // pred_check_branch
      %549 = sbr.rel (0) target = $region53
    $region52: #{tpu_custom_call.1} parent=1 // pred_region
      %551 = vsyncadd [#allocation4], 0
      %s552 = sshll.u32 [#allocation11], 4
      %s553 = int_to_ptr.vmem [resolvable:$true] %s552
      %s554 = sshll.u32 %s7, 4
      %s555 = int_to_ptr.hbm [resolvable:$true] %s554
      %560 = dma.vmem_to_hbm [thread:$0]  %s553, 512, %s555, [#allocation4], 128, 128, 8
    $region53: #{tpu_custom_call.1} parent=1 // pred_fallthru
      _
    // Predicated region
    $region54: #{tpu_custom_call.1} parent=1 // pred_check
      _
    $region55: #{tpu_custom_call.1} parent=1 // pred_check_branch
      %562 = sbr.rel (0) target = $region57
    $region56: #{tpu_custom_call.1} parent=1 // pred_region
      %564 = dma.done [#allocation4], 512
    $region57: #{tpu_custom_call.1} parent=1 // pred_fallthru
      _
    %565 = vsyncpa [#allocation3], 1
    %566 = vsyncpa [#allocation6], 1
    %567 = vsyncpa [#allocation9], 1
    %568 = vsyncpa [#allocation4], 1

</llo_original>
